<compile_context>
chip_gen: v7x
topology: tpu7x:2x2x1
jax: 0.10.0
libtpu: 0.0.40
codegen_flags: <defaults>
</compile_context>

<pallas_src>
import jax
import jax.numpy as jnp
from jax.experimental import pallas as pl
from jax.experimental.pallas import tpu as pltpu

_LANE = 128                      # TPU lane width
_BLOCK_BYTES = 4 * 1024 * 1024   # ~4 MiB per block per buffer
_VMEM_LIMIT = 32 * 1024 * 1024   # 16 MiB live (in+out, double-buffered) + headroom


def _swish_kernel(beta_ref, x_ref, o_ref):
    # beta_ref: (1,) f32 in SMEM; x_ref/o_ref: (tile_rows, cols) tiles in VMEM.
    beta = beta_ref[0]
    x = x_ref[...].astype(jnp.float32)          # f32 math (v5e has no bf16 VPU/EUP)
    z = beta * x
    # Exact divide (kernel is DMA-bound, so this is free). exp(-z) -> inf for
    # very negative z gives 1/(1+inf) == 0 exactly; no inf/NaN escapes.
    sig = 1.0 / (1.0 + jnp.exp(-z))
    o_ref[...] = (x * sig).astype(o_ref.dtype)  # explicit cast to output dtype


def _sublane_multiple(dtype) -> int:
    # Min second-to-last block dim: 8 for 32-bit, 16 for 16-bit, 32 for 8-bit.
    return 8 * max(1, 4 // jnp.dtype(dtype).itemsize)


def _pick_2d_view(x):
    """Present x as a lane-dense (rows, cols) slab without a padded copy when possible.

    Returns (x2d, rows, cols, padded).
    """
    total = x.size
    last = x.shape[-1] if x.ndim >= 1 else 1
    if x.ndim >= 2 and last % _LANE == 0:
        # Natural collapse over leading dims: no data movement at all.
        cols = last
        rows = total // cols
        return x.reshape(rows, cols), rows, cols, False
    # Flat repack: pick the widest lane-aligned width that divides the element count.
    for cols in (4096, 2048, 1024, 512, 256, 128):
        if total >= cols and total % cols == 0:
            rows = total // cols
            return x.reshape(rows, cols), rows, cols, False
    # Ragged element count (rare, tiny shapes): fall back to a padded flat copy.
    cols = _LANE
    rows = (total + cols - 1) // cols
    flat = jnp.pad(x.reshape(-1), (0, rows * cols - total))  # swish(0) == 0, harmless
    return flat.reshape(rows, cols), rows, cols, True


def swish(x: jnp.ndarray, beta) -> jnp.ndarray:
    """Elementwise x * sigmoid(beta * x); x: any-shape float array, beta: scalar f32."""
    orig_shape = x.shape
    orig_dtype = x.dtype
    total = x.size

    x2d, rows, cols, padded = _pick_2d_view(x)
    itemsize = jnp.dtype(orig_dtype).itemsize
    sub = _sublane_multiple(orig_dtype)

    # ~4 MiB per block; 16-bit dtypes automatically get 2x rows for the same bytes.
    tile_rows = max(sub, (_BLOCK_BYTES // (cols * itemsize)) // sub * sub)
    if tile_rows >= rows:
        tile_rows = rows                               # single full-extent block (always legal)
    grid_rows = (rows + tile_rows - 1) // tile_rows    # ragged edge block masked by Pallas

    beta_arr = jnp.asarray(beta, dtype=jnp.float32).reshape((1,))

    out2d = pl.pallas_call(
        _swish_kernel,
        out_shape=jax.ShapeDtypeStruct((rows, cols), orig_dtype),
        grid_spec=pl.GridSpec(
            grid=(grid_rows,),
            in_specs=[
                pl.BlockSpec(memory_space=pltpu.SMEM),               # beta scalar
                pl.BlockSpec((tile_rows, cols), lambda i: (i, 0)),   # input tile
            ],
            out_specs=pl.BlockSpec((tile_rows, cols), lambda i: (i, 0)),
        ),
        compiler_params=pltpu.CompilerParams(
            dimension_semantics=("parallel",),   # TODO(synk): CORE_PARALLEL on v7x
            vmem_limit_bytes=_VMEM_LIMIT,
        ),
    )(beta_arr, x2d)

    if padded:
        return out2d.reshape(-1)[:total].reshape(orig_shape)
    return out2d.reshape(orig_shape)


if __name__ == "__main__":
    key = jax.random.PRNGKey(0)
    beta = jnp.float32(1.0)  # deterministic init matching nn.Parameter(torch.tensor(1.0))

    # NCHW input consistent with ResidualBlock usage (flat repack path, no pad).
    x = jax.random.normal(key, (2, 4, 16, 16), dtype=jnp.float32)
    y = jax.block_until_ready(swish(x, beta))
    ref = x * jax.nn.sigmoid(beta * x)
    assert jnp.allclose(y, ref, atol=1e-4, rtol=1e-4), "f32 NCHW mismatch vs reference"

    # Lane-aligned last dim (natural collapse path: zero reshape/pad copies).
    x2 = jax.random.normal(jax.random.PRNGKey(2), (2, 8, 256), dtype=jnp.float32)
    y2 = jax.block_until_ready(swish(x2, beta))
    ref2 = x2 * jax.nn.sigmoid(beta * x2)
    assert jnp.allclose(y2, ref2, atol=1e-4, rtol=1e-4), "f32 lane-aligned mismatch"

    # bf16 with a ragged element count (exercises padded fallback + dtype casts).
    xb = jax.random.normal(jax.random.PRNGKey(1), (3, 5, 7), dtype=jnp.bfloat16)
    yb = jax.block_until_ready(swish(xb, beta))
    xb32 = xb.astype(jnp.float32)
    refb = xb32 * jax.nn.sigmoid(beta * xb32)
    assert jnp.allclose(yb.astype(jnp.float32), refb, atol=1e-2, rtol=1e-2), "bf16 mismatch"

    print("KERNEL_OK")
</pallas_src>

<mosaic_0001>
module attributes {stable_mosaic.version = 11 : i64} {
  func.func @_swish_kernel(%arg0: i32, %arg1: memref<1xf32, #tpu.memory_space<smem>>, %arg2: memref<1x2048xf32, #tpu.memory_space<vmem>>, %arg3: memref<1x2048xf32, #tpu.memory_space<vmem>>) attributes {dimension_semantics = [#tpu.dimension_semantics<parallel>], iteration_bounds = array<i64: 1>, scalar_prefetch = 0 : i64, scratch_operands = 0 : i64, tpu.core_type = #tpu.core_type<tc>, window_params = [{transform_indices = @transform_0, window_bounds = array<i64: 1>}, {transform_indices = @transform_1, window_bounds = array<i64: 1, 2048>}, {transform_indices = @transform_2, window_bounds = array<i64: 1, 2048>}]} {
    %c0 = arith.constant 0 : index
    %0 = memref.load %arg1[%c0] : memref<1xf32, #tpu.memory_space<smem>>
    %c0_0 = arith.constant 0 : index
    %c0_1 = arith.constant 0 : index
    %1 = vector.load %arg2[%c0_0, %c0_1] : memref<1x2048xf32, #tpu.memory_space<vmem>>, vector<1x2048xf32>
    %2 = vector.broadcast %0 : f32 to vector<1x2048xf32>
    %3 = arith.mulf %2, %1 : vector<1x2048xf32>
    %cst = arith.constant 0.000000e+00 : f32
    %4 = vector.broadcast %cst : f32 to vector<1x2048xf32>
    %5 = arith.subf %4, %3 : vector<1x2048xf32>
    %6 = math.exp %5 : vector<1x2048xf32>
    %cst_2 = arith.constant 1.000000e+00 : f32
    %7 = vector.broadcast %cst_2 : f32 to vector<1x2048xf32>
    %8 = arith.addf %7, %6 : vector<1x2048xf32>
    %cst_3 = arith.constant 1.000000e+00 : f32
    %9 = vector.broadcast %cst_3 : f32 to vector<1x2048xf32>
    %10 = arith.divf %9, %8 : vector<1x2048xf32>
    %11 = arith.mulf %1, %10 : vector<1x2048xf32>
    %c0_4 = arith.constant 0 : index
    %c0_5 = arith.constant 0 : index
    %12 = vector.load %arg3[%c0_4, %c0_5] : memref<1x2048xf32, #tpu.memory_space<vmem>>, vector<1x2048xf32>
    tpu.vector_store %arg3[%c0_4, %c0_5], %11 {strides = array<i32>} : memref<1x2048xf32, #tpu.memory_space<vmem>>, vector<1x2048xf32>,
    return
  }
  func.func @transform_0(%arg0: i32) -> i32 {
    %c0_i32 = arith.constant 0 : i32
    %c0_i32_0 = arith.constant 0 : i32
    return %c0_i32 : i32
  }
  func.func @transform_1(%arg0: i32) -> (i32, i32) {
    %c0_i32 = arith.constant 0 : i32
    %c0_i32_0 = arith.constant 0 : i32
    return %arg0, %c0_i32 : i32, i32
  }
  func.func @transform_2(%arg0: i32) -> (i32, i32) {
    %c0_i32 = arith.constant 0 : i32
    %c0_i32_0 = arith.constant 0 : i32
    return %arg0, %c0_i32 : i32, i32
  }
}

</mosaic_0001>

<llo_original>
// kernel: tpu_custom_call.1
$region0: #{tpu_custom_call.1}
  #allocation0 [shape = 'u32[]', space=smem, size = 0x4, offset = 0x4, fixed_abs, tag = 'smem constant byte address 0x4 - core index']
  #allocation1 [shape = 'u32[144,128]{1,0:T(1,128)}', space=vmem, size = 0x12000, scoped, tag = 'internal scratch']
  #allocation2 [shape = 'f32[1]{0:T(128)S(6)}', space=smem, size = 0x200, scoped, tag = 'scoped memory for tpu_custom_call.1']
  %s0 = inlined_call_operand.<no memory space> [shape: f32[1], index: 0, kind: input, shape index: {}]
  %s1 = inlined_call_operand.hbm [shape: f32[1,2048], index: 1, kind: input, shape index: {}]
  %s2 = inlined_call_operand.hbm [shape: f32[1,2048], index: 2, kind: output, shape index: {}]
  %s3 = sld [smem:[#allocation0]]
  $region22: #{tpu_custom_call.1} parent=0
    _
  %s5 = ssub.s32 1, %s3
  %s6 = scalar_select 0, %s5, %s3
  %7 = sst [smem:[#allocation2]] %s0
  $region1: #{tpu_custom_call.1} parent=0
    #allocation3 [shape = 'u8[8192]{0}', space=vmem, size = 0x2000, scoped, tag = 'input window, operand 1, single buffered']
    #allocation4 [shape = 's32[1]{0}', space=sflag, size = 0x4, scoped, tag = 'scoped memory for tpu_custom_call.1']
    #allocation5 [shape = 's32[1]{0}', space=sflag, size = 0x4, scoped, tag = 'scoped memory for tpu_custom_call.1']
    #allocation6 [shape = 'u8[8192]{0}', space=vmem, size = 0x2000, scoped, tag = 'output window, operand 0, single buffered']
    %8 = vsyncpa [#allocation4], 0
    %9 = vsyncpa [#allocation5], 0
    // Predicated region
    $region2: #{tpu_custom_call.1} parent=1 // pred_check
      _
    $region3: #{tpu_custom_call.1} parent=1 // pred_check_branch
      %11 = sbr.rel (0) target = $region5
    $region4: #{tpu_custom_call.1} parent=1 // pred_region
      _
    $region5: #{tpu_custom_call.1} parent=1 // pred_fallthru
      _
    // Predicated region
    $region6: #{tpu_custom_call.1} parent=1 // pred_check
      _
    $region7: #{tpu_custom_call.1} parent=1 // pred_check_branch
      %13 = sbr.rel (0) target = $region9
    $region8: #{tpu_custom_call.1} parent=1 // pred_region
      %s15 = ssub.s32 256, 256
      %16 = vsyncadd [#allocation4], %s15
      %s18 = sshll.u32 [#allocation3], 4
      %s19 = int_to_ptr.vmem [resolvable:$true] %s18
      %21 = dma.hbm_to_vmem [thread:$0]  %s1, 256, %s19, [#allocation4]
    $region9: #{tpu_custom_call.1} parent=1 // pred_fallthru
      _
    // Predicated region
    $region10: #{tpu_custom_call.1} parent=1 // pred_check
      _
    $region11: #{tpu_custom_call.1} parent=1 // pred_check_branch
      %23 = sbr.rel (0) target = $region13
    $region12: #{tpu_custom_call.1} parent=1 // pred_region
      %24 = dma.done [#allocation4], 256
    $region13: #{tpu_custom_call.1} parent=1 // pred_fallthru
      _
    %s25 = sld [smem:[#allocation2]]
    %v26 = vld [vmem:[#allocation3] sm:$0xff]
    %v27 = vld [vmem:[#allocation3 + $0x8] sm:$0xff]
    %v28 = vstv %s25
    %v29 = vmul.f32 %v28, %v26
    %v30 = vmul.f32 %v28, %v27
    %v31 = vsub.f32 0.0, %v29
    %v32 = vsub.f32 0.0, %v30
    %v33 = vmul.f32 %v31, 1.442695
    %v34 = vpow.pop %v33
    %v35 = vmul.f32 %v32, 1.442695
    %v36 = vpow.pop %v35
    %v37 = vadd.f32 %v34, 1.0
    %v38 = vadd.f32 %v36, 1.0
    %v39 = vrcp.pop %v37
    %v40 = vmul.f32 1.0, %v39
    %v41 = vrcp.pop %v38
    %v42 = vmul.f32 1.0, %v41
    %v43 = vmul.f32 %v26, %v40
    %v44 = vmul.f32 %v27, %v42
    %45 = vst [vmem:[#allocation6] sm:$0xff] %v43
    %46 = vst [vmem:[#allocation6 + $0x8] sm:$0xff] %v44
    // Predicated region
    $region14: #{tpu_custom_call.1} parent=1 // pred_check
      _
    $region15: #{tpu_custom_call.1} parent=1 // pred_check_branch
      %48 = sbr.rel (0) target = $region17
    $region16: #{tpu_custom_call.1} parent=1 // pred_region
      %s50 = ssub.s32 256, 256
      %51 = vsyncadd [#allocation5], %s50
      %s53 = sshll.u32 [#allocation6], 4
      %s54 = int_to_ptr.vmem [resolvable:$true] %s53
      %56 = dma.vmem_to_hbm [thread:$0]  %s54, 256, %s2, [#allocation5]
    $region17: #{tpu_custom_call.1} parent=1 // pred_fallthru
      _
    // Predicated region
    $region18: #{tpu_custom_call.1} parent=1 // pred_check
      _
    $region19: #{tpu_custom_call.1} parent=1 // pred_check_branch
      %58 = sbr.rel (0) target = $region21
    $region20: #{tpu_custom_call.1} parent=1 // pred_region
      %59 = dma.done [#allocation5], 256
    $region21: #{tpu_custom_call.1} parent=1 // pred_fallthru
      _
    %60 = vsyncpa [#allocation4], 1
    %61 = vsyncpa [#allocation5], 1

</llo_original>
